<compile_context>
chip_gen: v7x
topology: tpu7x:2x2x1
jax: 0.10.0
libtpu: 0.0.40
codegen_flags: <defaults>
</compile_context>

<pallas_src>
import functools
import numpy as np
import jax
import jax.numpy as jnp
from jax.experimental import pallas as pl
from jax.experimental.pallas import tpu as pltpu


# ----------------------------- numpy parameter setup -----------------------------

def _round_up(x, m):
    return ((x + m - 1) // m) * m


def _hann_periodic(win_length: int) -> np.ndarray:
    # scipy.signal.get_window('hann', win_length, fftbins=True)
    n = np.arange(win_length)
    return (0.5 - 0.5 * np.cos(2.0 * np.pi * n / win_length)).astype(np.float32)


def _window_sumsquare(win: np.ndarray, n_frames: int, hop_length: int, n_fft: int) -> np.ndarray:
    # librosa window_sumsquare with norm=None and win_length == n_fft
    n = n_fft + hop_length * (n_frames - 1)
    x = np.zeros(n, dtype=np.float32)
    win_sq = win.astype(np.float32) ** 2
    for i in range(n_frames):
        sample = i * hop_length
        x[sample:min(n, sample + n_fft)] += win_sq[:max(0, min(n_fft, n - sample))]
    return x


# ----------------------------- Pallas kernels -----------------------------

def _transform_kernel(framesT_ref, basis_ref, real_ref, imag_ref, mag_ref, *, cutoff):
    # framesT: (1, L, Ttile)   basis: (2*cutoff, L)   outputs: (1, cutoff, Ttile)
    ft = framesT_ref[0]                                                 # (L, Ttile)
    # single fused MXU dot for real+imag, lane-dense output (frames on lanes)
    spec = jnp.dot(basis_ref[...], ft, preferred_element_type=jnp.float32)
    re = spec[:cutoff, :]
    im = spec[cutoff:, :]
    real_ref[0] = re
    imag_ref[0] = im
    mag_ref[0] = jnp.sqrt(re * re + im * im)


def _inverse_kernel(mag_ref, ph_ref, ibc_ref, ibs_ref, corr_ref, out_ref,
                    *, hop, n_sub, t_tile):
    # mag/ph:   (1, cutoff, Ttile)
    # ibc/ibs:  (L, cutoff)       (inverse basis, transposed, split cos/sin halves)
    # corr:     (1, hop, nb_pad)  (window-sumsquare correction in (hop, block) layout)
    # out:      (1, hop, nb_pad)  per-batch resident accumulator (overlap-add target)
    tt = pl.program_id(1)

    @pl.when(tt == 0)
    def _init():
        out_ref[...] = jnp.zeros_like(out_ref)

    mag = mag_ref[0]                                                   # (cutoff, Ttile)
    ph = ph_ref[0]
    rc = mag * jnp.cos(ph)                                             # magnitude * cos(phase)
    rs = mag * jnp.sin(ph)                                             # magnitude * sin(phase)

    # per-frame synthesis, lane-dense: (L, cutoff) @ (cutoff, Ttile) -> (L, Ttile)
    fo = jnp.dot(ibc_ref[...], rc, preferred_element_type=jnp.float32)
    fo = fo + jnp.dot(ibs_ref[...], rs, preferred_element_type=jnp.float32)

    # explicit overlap-add: L/hop shifted adds into the resident (hop, n_blocks) slab
    base = pl.multiple_of(tt * t_tile, t_tile)
    for r in range(n_sub):
        out_ref[0, :, pl.ds(base + r, t_tile)] += fo[r * hop:(r + 1) * hop, :]

    @pl.when(tt == pl.num_programs(1) - 1)
    def _finalize():
        out_ref[...] = out_ref[...] * corr_ref[...]


# ----------------------------- STFT module (Pallas) -----------------------------

class STFTPallas:
    def __init__(self, filter_length=16, hop_length=4, win_length=16, window='hann'):
        assert filter_length % hop_length == 0, "overlap-add kernel assumes hop | filter_length"
        self.filter_length = filter_length
        self.hop_length = hop_length
        self.win_length = win_length
        self.window = window

        scale = self.filter_length / self.hop_length
        fourier_basis = np.fft.fft(np.eye(self.filter_length))
        cutoff = int(self.filter_length / 2 + 1)
        self.cutoff = cutoff
        fourier_basis = np.vstack([np.real(fourier_basis[:cutoff, :]),
                                   np.imag(fourier_basis[:cutoff, :])])
        forward_basis = fourier_basis.astype(np.float32)                            # (2c, L)
        inverse_basis = np.linalg.pinv(scale * fourier_basis).T.astype(np.float32)  # (2c, L)

        if window is not None:
            assert filter_length >= win_length
            fft_window = _hann_periodic(win_length)
            # pad_center(fft_window, filter_length) is identity (win_length == filter_length)
            forward_basis = forward_basis * fft_window[None, :]
            inverse_basis = inverse_basis * fft_window[None, :]
            self.fft_window = fft_window
        else:
            self.fft_window = None

        self.forward_basis = forward_basis          # (2c, L) numpy buffer
        self.inverse_basis = inverse_basis          # (2c, L) numpy buffer

        # device-resident constants built ONCE (no per-call host construction / transfer)
        self.forward_basis_j = jnp.asarray(forward_basis)              # (2c, L)
        self.inv_cos_T = jnp.asarray(inverse_basis[:cutoff].T)         # (L, c)
        self.inv_sin_T = jnp.asarray(inverse_basis[cutoff:].T)         # (L, c)
        self._corr_cache = {}

    # ---- window-sumsquare correction, cached per (T, padded length) ----
    def _get_corr(self, T, nb_pad):
        key = (T, nb_pad)
        if key not in self._corr_cache:
            L, hop = self.filter_length, self.hop_length
            n_sub = L // hop
            n_blocks = T - 1 + n_sub
            n_out = hop * n_blocks
            if self.window is not None:
                win_sum = _window_sumsquare(self.fft_window, T, hop, L)
                tiny = np.finfo(np.float32).tiny
                scale = float(L) / float(hop)
                corr = np.where(win_sum > tiny, scale / win_sum, scale).astype(np.float32)
            else:
                corr = np.ones(n_out, dtype=np.float32)
            corrT = np.zeros((1, hop, nb_pad), dtype=np.float32)
            corrT[0, :, :n_blocks] = corr.reshape(n_blocks, hop).T
            self._corr_cache[key] = jnp.asarray(corrT)
        return self._corr_cache[key]

    # ---- transform: reflect-pad + strided conv1d (fused lane-dense matmul) ----
    def transform(self, input_data):
        B, num_samples = input_data.shape
        L, hop, cutoff = self.filter_length, self.hop_length, self.cutoff
        pad = L // 2

        x_pad = jnp.pad(input_data.astype(jnp.float32), ((0, 0), (pad, pad)), mode='reflect')
        T = (x_pad.shape[1] - L) // hop + 1

        t_tile = min(512, _round_up(T, 128))
        T_pad = _round_up(T, t_tile)

        # TODO(synk): frames carry L/hop-fold redundant HBM traffic; building them
        # in-kernel from the raw signal with strided pl.ds reads would cut this ~4x.
        needed = (T_pad - 1) * hop + L
        x_ext = jnp.pad(x_pad, ((0, 0), (0, max(0, needed - x_pad.shape[1]))))
        idxT = jnp.arange(L)[:, None] + hop * jnp.arange(T_pad)[None, :]
        frames_T = jnp.take(x_ext, idxT, axis=1)                        # (B, L, T_pad)

        out_sd = jax.ShapeDtypeStruct((B, cutoff, T_pad), jnp.float32)
        spec_out = pl.BlockSpec((1, cutoff, t_tile), lambda b, tt: (b, 0, tt))
        real, imag, magnitude = pl.pallas_call(
            functools.partial(_transform_kernel, cutoff=cutoff),
            out_shape=(out_sd, out_sd, out_sd),
            grid=(B, T_pad // t_tile),
            in_specs=[pl.BlockSpec((1, L, t_tile), lambda b, tt: (b, 0, tt)),
                      pl.BlockSpec((2 * cutoff, L), lambda b, tt: (0, 0))],
            out_specs=(spec_out, spec_out, spec_out),
            compiler_params=pltpu.CompilerParams(
                dimension_semantics=("parallel", "parallel"),
                vmem_limit_bytes=32 * 1024 * 1024),
        )(frames_T, self.forward_basis_j)

        magnitude = magnitude[:, :, :T]
        # TODO(synk): phase stays in plain JAX (atan2 lowering in Mosaic not assumed);
        # fusing it into the kernel would remove the real/imag HBM round trip.
        phase = jnp.arctan2(imag[:, :, :T], real[:, :, :T])
        return magnitude, phase

    # ---- inverse: per-frame synthesis matmul + explicit overlap-add + correction ----
    def inverse(self, magnitude, phase):
        B, cutoff, T = magnitude.shape
        L, hop = self.filter_length, self.hop_length
        n_sub = L // hop
        t_tile = min(512, _round_up(T, 128))
        T_pad = _round_up(T, t_tile)
        n_blocks = T - 1 + n_sub                      # n_out == hop * n_blocks
        n_out = hop * n_blocks
        nb_pad = _round_up(T_pad + n_sub - 1, 128)

        corrT = self._get_corr(T, nb_pad)                               # (1, hop, nb_pad)

        mag_p = jnp.pad(magnitude.astype(jnp.float32), ((0, 0), (0, 0), (0, T_pad - T)))
        ph_p = jnp.pad(phase.astype(jnp.float32), ((0, 0), (0, 0), (0, T_pad - T)))

        spec_in = pl.BlockSpec((1, cutoff, t_tile), lambda b, tt: (b, 0, tt))
        out_blocks = pl.pallas_call(
            functools.partial(_inverse_kernel, hop=hop, n_sub=n_sub, t_tile=t_tile),
            out_shape=jax.ShapeDtypeStruct((B, hop, nb_pad), jnp.float32),
            grid=(B, T_pad // t_tile),
            in_specs=[spec_in, spec_in,
                      pl.BlockSpec((L, cutoff), lambda b, tt: (0, 0)),
                      pl.BlockSpec((L, cutoff), lambda b, tt: (0, 0)),
                      pl.BlockSpec((1, hop, nb_pad), lambda b, tt: (0, 0, 0))],
            out_specs=pl.BlockSpec((1, hop, nb_pad), lambda b, tt: (b, 0, 0)),
            compiler_params=pltpu.CompilerParams(
                dimension_semantics=("parallel", "arbitrary"),
                vmem_limit_bytes=32 * 1024 * 1024),
        )(mag_p, ph_p, self.inv_cos_T, self.inv_sin_T, corrT)

        out = out_blocks[:, :, :n_blocks]             # (B, hop, n_blocks)
        out = out.transpose(0, 2, 1).reshape(B, n_out)  # de-interleave hop-phase layout
        out = out[:, L // 2: n_out - L // 2]
        return out[:, None, :]                        # (B, 1, num_samples)

    def forward(self, input_data):
        self.magnitude, self.phase = self.transform(input_data)
        reconstruction = self.inverse(self.magnitude, self.phase)
        return reconstruction


# ----------------------------- plain-JAX reference (for checking) -----------------------------

def _reference_forward(stft, x):
    L, hop, cutoff = stft.filter_length, stft.hop_length, stft.cutoff
    pad = L // 2
    xp = jnp.pad(x.astype(jnp.float32), ((0, 0), (pad, pad)), mode='reflect')
    T = (xp.shape[1] - L) // hop + 1
    idx = jnp.arange(T)[:, None] * hop + jnp.arange(L)[None, :]
    frames = xp[:, idx]                                                 # (B, T, L)
    spec = jnp.einsum('btl,fl->bft', frames, jnp.asarray(stft.forward_basis))
    re, im = spec[:, :cutoff], spec[:, cutoff:]
    mag = jnp.sqrt(re * re + im * im)
    ph = jnp.arctan2(im, re)
    rec = jnp.concatenate([mag * jnp.cos(ph), mag * jnp.sin(ph)], axis=1)
    fo = jnp.einsum('bft,fl->btl', rec, jnp.asarray(stft.inverse_basis))
    n_out = (T - 1) * hop + L
    out = jnp.zeros((x.shape[0], n_out), jnp.float32)
    for t in range(T):
        out = out.at[:, t * hop:t * hop + L].add(fo[:, t])
    if stft.window is not None:
        win_sum = _window_sumsquare(stft.fft_window, T, hop, L)
        tiny = np.finfo(np.float32).tiny
        scale = float(L) / float(hop)
        corr = np.where(win_sum > tiny, scale / win_sum, scale).astype(np.float32)
        out = out * corr[None, :]
    out = out[:, L // 2: n_out - L // 2]
    return out[:, None, :]


# ----------------------------- main -----------------------------

if __name__ == "__main__":
    key = jax.random.PRNGKey(0)
    B, num_samples = 2, 64
    x = jax.random.normal(key, (B, num_samples), dtype=jnp.float32)

    stft = STFTPallas(filter_length=16, hop_length=4, win_length=16, window='hann')
    y = stft.forward(x)
    jax.block_until_ready(y)

    assert y.shape == (B, 1, num_samples), y.shape

    y_ref = _reference_forward(stft, x)
    err = float(jnp.max(jnp.abs(y - y_ref)))
    assert np.isfinite(err) and err < 1e-2, f"max abs error vs reference: {err}"

    print("KERNEL_OK")
</pallas_src>

<mosaic_0001>
module attributes {stable_mosaic.version = 11 : i64} {
  func.func @_transform_kernel(%arg0: i32, %arg1: i32, %arg2: memref<1x16x128xf32, #tpu.memory_space<vmem>>, %arg3: memref<18x16xf32, #tpu.memory_space<vmem>>, %arg4: memref<1x9x128xf32, #tpu.memory_space<vmem>>, %arg5: memref<1x9x128xf32, #tpu.memory_space<vmem>>, %arg6: memref<1x9x128xf32, #tpu.memory_space<vmem>>) attributes {dimension_semantics = [#tpu.dimension_semantics<parallel>, #tpu.dimension_semantics<parallel>], iteration_bounds = array<i64: 2, 1>, scalar_prefetch = 0 : i64, scratch_operands = 0 : i64, tpu.core_type = #tpu.core_type<tc>, window_params = [{transform_indices = @transform_0, window_bounds = array<i64: 1, 16, 128>}, {pipeline_mode = #tpu.pipeline_mode<synchronous>, transform_indices = @transform_1, window_bounds = array<i64: 18, 16>}, {transform_indices = @transform_2, window_bounds = array<i64: 1, 9, 128>}, {transform_indices = @transform_3, window_bounds = array<i64: 1, 9, 128>}, {transform_indices = @transform_4, window_bounds = array<i64: 1, 9, 128>}]} {
    %c0 = arith.constant 0 : index
    %c0_0 = arith.constant 0 : index
    %c0_1 = arith.constant 0 : index
    %0 = vector.load %arg2[%c0, %c0_0, %c0_1] : memref<1x16x128xf32, #tpu.memory_space<vmem>>, vector<1x16x128xf32>
    %1 = vector.shape_cast %0 : vector<1x16x128xf32> to vector<16x128xf32>
    %c0_2 = arith.constant 0 : index
    %c0_3 = arith.constant 0 : index
    %2 = vector.load %arg3[%c0_2, %c0_3] : memref<18x16xf32, #tpu.memory_space<vmem>>, vector<18x16xf32>
    %cst = arith.constant dense<0.000000e+00> : vector<18x128xf32>
    %3 = tpu.matmul %2, %1, %cst {dimension_numbers = #tpu.dot_dimension_numbers<[1], [0], [0], [1], [0, 0, 1, 1], [], []>} : vector<18x16xf32>, vector<16x128xf32>, vector<18x128xf32> -> vector<18x128xf32>
    %4 = vector.extract_strided_slice %3 {offsets = [0, 0], sizes = [9, 128], strides = [1, 1]} : vector<18x128xf32> to vector<9x128xf32>
    %5 = vector.extract_strided_slice %3 {offsets = [9, 0], sizes = [9, 128], strides = [1, 1]} : vector<18x128xf32> to vector<9x128xf32>
    %c0_4 = arith.constant 0 : index
    %c0_5 = arith.constant 0 : index
    %c0_6 = arith.constant 0 : index
    %6 = vector.load %arg4[%c0_4, %c0_5, %c0_6] : memref<1x9x128xf32, #tpu.memory_space<vmem>>, vector<1x9x128xf32>
    %7 = vector.shape_cast %6 : vector<1x9x128xf32> to vector<9x128xf32>
    %8 = vector.shape_cast %4 : vector<9x128xf32> to vector<1x9x128xf32>
    tpu.vector_store %arg4[%c0_4, %c0_5, %c0_6], %8 {strides = array<i32>} : memref<1x9x128xf32, #tpu.memory_space<vmem>>, vector<1x9x128xf32>,
    %c0_7 = arith.constant 0 : index
    %c0_8 = arith.constant 0 : index
    %c0_9 = arith.constant 0 : index
    %9 = vector.load %arg5[%c0_7, %c0_8, %c0_9] : memref<1x9x128xf32, #tpu.memory_space<vmem>>, vector<1x9x128xf32>
    %10 = vector.shape_cast %9 : vector<1x9x128xf32> to vector<9x128xf32>
    %11 = vector.shape_cast %5 : vector<9x128xf32> to vector<1x9x128xf32>
    tpu.vector_store %arg5[%c0_7, %c0_8, %c0_9], %11 {strides = array<i32>} : memref<1x9x128xf32, #tpu.memory_space<vmem>>, vector<1x9x128xf32>,
    %12 = arith.mulf %4, %4 : vector<9x128xf32>
    %13 = arith.mulf %5, %5 : vector<9x128xf32>
    %14 = arith.addf %12, %13 : vector<9x128xf32>
    %15 = math.sqrt %14 : vector<9x128xf32>
    %c0_10 = arith.constant 0 : index
    %c0_11 = arith.constant 0 : index
    %c0_12 = arith.constant 0 : index
    %16 = vector.load %arg6[%c0_10, %c0_11, %c0_12] : memref<1x9x128xf32, #tpu.memory_space<vmem>>, vector<1x9x128xf32>
    %17 = vector.shape_cast %16 : vector<1x9x128xf32> to vector<9x128xf32>
    %18 = vector.shape_cast %15 : vector<9x128xf32> to vector<1x9x128xf32>
    tpu.vector_store %arg6[%c0_10, %c0_11, %c0_12], %18 {strides = array<i32>} : memref<1x9x128xf32, #tpu.memory_space<vmem>>, vector<1x9x128xf32>,
    return
  }
  func.func @transform_0(%arg0: i32, %arg1: i32) -> (i32, i32, i32) {
    %c0_i32 = arith.constant 0 : i32
    %c0_i32_0 = arith.constant 0 : i32
    return %arg0, %c0_i32, %arg1 : i32, i32, i32
  }
  func.func @transform_1(%arg0: i32, %arg1: i32) -> (i32, i32) {
    %c0_i32 = arith.constant 0 : i32
    %c0_i32_0 = arith.constant 0 : i32
    %c0_i32_1 = arith.constant 0 : i32
    return %c0_i32, %c0_i32_0 : i32, i32
  }
  func.func @transform_2(%arg0: i32, %arg1: i32) -> (i32, i32, i32) {
    %c0_i32 = arith.constant 0 : i32
    %c0_i32_0 = arith.constant 0 : i32
    return %arg0, %c0_i32, %arg1 : i32, i32, i32
  }
  func.func @transform_3(%arg0: i32, %arg1: i32) -> (i32, i32, i32) {
    %c0_i32 = arith.constant 0 : i32
    %c0_i32_0 = arith.constant 0 : i32
    return %arg0, %c0_i32, %arg1 : i32, i32, i32
  }
  func.func @transform_4(%arg0: i32, %arg1: i32) -> (i32, i32, i32) {
    %c0_i32 = arith.constant 0 : i32
    %c0_i32_0 = arith.constant 0 : i32
    return %arg0, %c0_i32, %arg1 : i32, i32, i32
  }
}

</mosaic_0001>

<llo_original>
// kernel: tpu_custom_call.1
$region0: #{tpu_custom_call.1}
  #allocation0 [shape = 'u32[]', space=smem, size = 0x4, offset = 0x4, fixed_abs, tag = 'smem constant byte address 0x4 - core index']
  #allocation1 [shape = 'u32[144,128]{1,0:T(1,128)}', space=vmem, size = 0x12000, scoped, tag = 'internal scratch']
  %s0 = inlined_call_operand.vmem [shape: f32[2,16,128], index: 0, kind: input, shape index: {}]
  %s1 = inlined_call_operand.vmem [shape: f32[18,16], index: 1, kind: input, shape index: {}]
  %s2 = inlined_call_operand.vmem [shape: f32[2,9,128], index: 2, kind: output, shape index: {0}]
  %s3 = inlined_call_operand.vmem [shape: f32[2,9,128], index: 3, kind: output, shape index: {1}]
  %s4 = inlined_call_operand.vmem [shape: f32[2,9,128], index: 4, kind: output, shape index: {2}]
  %5 = xla_tuple %s2, %s3, %s4
  %s6 = sld [smem:[#allocation0]]
  $region57: #{tpu_custom_call.1} parent=0
    _
  %s8 = ssub.s32 1, %s6
  %s9 = scalar_select 0, %s8, %s6
  loop: start=0, step=1, limit=4
  $region2: #{tpu_custom_call.1} parent=0 // loop_pre_header
    _
  $region3: #{tpu_custom_call.1} parent=0 // loop_header
    %s11 = sphi 0, %s15
    %p12 = scmp.ge.s32.totalorder %s11, 4
    %s18 = sphi 0, %s30
    %s19 = sphi 0, %s26
    %s20 = sphi 0, %s18
    %s21 = sphi 0, %s19
    %s22 = sphi 0, %s20
    %s23 = sphi 0, %s21
    %s35 = sphi 0, %s37
    %s38 = sphi 0, %s35
    %s39 = sphi 0, %s38
    %s55 = sphi 0, %s39
    %s59 = sphi 0, %s59
    %s61 = sphi 0, %s59
    %s62 = sphi 0, %s61
    %s76 = sphi 0, %s62
    %s84 = sphi 0, %s86
    %s87 = sphi 0, %s84
    %s88 = sphi 0, %s87
    %s104 = sphi 0, %s88
    %s112 = sphi 0, %s114
    %s115 = sphi 0, %s112
    %s116 = sphi 0, %s115
    %s132 = sphi 0, %s116
    %s140 = sphi 0, %s142
    %s143 = sphi 0, %s140
    %s144 = sphi 0, %s143
    %s160 = sphi 0, %s144
  $region4: #{tpu_custom_call.1} parent=0 // loop_header_branch
    %14 = sbr.rel (%p12) target = $region8
  $region5: #{tpu_custom_call.1} parent=0 // loop_body
    %s16 = ssub.s32 %s11, 1
    %s17 = ssub.s32 %s11, 2
    %s24 = sadd.s32 1, %s19
    %p25 = scmp.ge.s32.totalorder %s24, 1
    %s26 = scalar_select %p25, 0, %s24
    %s27 = sadd.s32 1, %s18
    %s28 = scalar_select %p25, %s27, %s18
    %p29 = scmp.ge.s32.totalorder %s28, 2
    %s30 = scalar_select %p29, 0, %s28
    %s31 = ssub.s32 %s18, %s30
    %s32 = ssub.s32 %s19, %s26
    %s33 = sor.u32 %s31, %s32
    %p34 = scmp.eq.s32.totalorder %s33, 0
    %s36 = sadd.s32 %s35, 1
    %s37 = scalar_select %p34, %s35, %s36
    %p40 = pneg %p34
    %p41 = scmp.eq.s32.totalorder %s11, 1
    %p42 = por %p40, %p41
    %p43 = scmp.ne.s32.totalorder %s35, %s38
    %p44 = scmp.eq.s32.totalorder %s11, 0
    %p45 = por %p43, %p44
    %p46 = scmp.ne.s32.totalorder %s35, %s38
    %p47 = scmp.eq.s32.totalorder %s16, 1
    %p48 = por %p46, %p47
    %p49 = scmp.ne.s32.totalorder %s38, %s39
    %p50 = scmp.eq.s32.totalorder %s16, 0
    %p51 = por %p49, %p50
    %p52 = scmp.ne.s32.totalorder %s38, %s39
    %p53 = scmp.eq.s32.totalorder %s17, 1
    %p54 = por %p52, %p53
    %p56 = scmp.ne.s32.totalorder %s39, %s55
    %p57 = scmp.eq.s32.totalorder %s17, 0
    %p58 = por %p56, %p57
    %s60 = sadd.s32 %s59, 1
    %p63 = scmp.eq.s32.totalorder %s11, 1
    %p64 = scmp.ne.s32.totalorder %s59, %s61
    %p65 = scmp.eq.s32.totalorder %s11, 0
    %p66 = por %p64, %p65
    %p67 = scmp.ne.s32.totalorder %s59, %s61
    %p68 = scmp.eq.s32.totalorder %s16, 1
    %p69 = por %p67, %p68
    %p70 = scmp.ne.s32.totalorder %s61, %s62
    %p71 = scmp.eq.s32.totalorder %s16, 0
    %p72 = por %p70, %p71
    %p73 = scmp.ne.s32.totalorder %s61, %s62
    %p74 = scmp.eq.s32.totalorder %s17, 1
    %p75 = por %p73, %p74
    %p77 = scmp.ne.s32.totalorder %s62, %s76
    %p78 = scmp.eq.s32.totalorder %s17, 0
    %p79 = por %p77, %p78
    %s80 = ssub.s32 %s18, %s30
    %s81 = ssub.s32 %s19, %s26
    %s82 = sor.u32 %s80, %s81
    %p83 = scmp.eq.s32.totalorder %s82, 0
    %s85 = sadd.s32 %s84, 1
    %s86 = scalar_select %p83, %s84, %s85
    %p89 = pneg %p83
    %p90 = scmp.eq.s32.totalorder %s11, 1
    %p91 = por %p89, %p90
    %p92 = scmp.ne.s32.totalorder %s84, %s87
    %p93 = scmp.eq.s32.totalorder %s11, 0
    %p94 = por %p92, %p93
    %p95 = scmp.ne.s32.totalorder %s84, %s87
    %p96 = scmp.eq.s32.totalorder %s16, 1
    %p97 = por %p95, %p96
    %p98 = scmp.ne.s32.totalorder %s87, %s88
    %p99 = scmp.eq.s32.totalorder %s16, 0
    %p100 = por %p98, %p99
    %p101 = scmp.ne.s32.totalorder %s87, %s88
    %p102 = scmp.eq.s32.totalorder %s17, 1
    %p103 = por %p101, %p102
    %p105 = scmp.ne.s32.totalorder %s88, %s104
    %p106 = scmp.eq.s32.totalorder %s17, 0
    %p107 = por %p105, %p106
    %s108 = ssub.s32 %s18, %s30
    %s109 = ssub.s32 %s19, %s26
    %s110 = sor.u32 %s108, %s109
    %p111 = scmp.eq.s32.totalorder %s110, 0
    %s113 = sadd.s32 %s112, 1
    %s114 = scalar_select %p111, %s112, %s113
    %p117 = pneg %p111
    %p118 = scmp.eq.s32.totalorder %s11, 1
    %p119 = por %p117, %p118
    %p120 = scmp.ne.s32.totalorder %s112, %s115
    %p121 = scmp.eq.s32.totalorder %s11, 0
    %p122 = por %p120, %p121
    %p123 = scmp.ne.s32.totalorder %s112, %s115
    %p124 = scmp.eq.s32.totalorder %s16, 1
    %p125 = por %p123, %p124
    %p126 = scmp.ne.s32.totalorder %s115, %s116
    %p127 = scmp.eq.s32.totalorder %s16, 0
    %p128 = por %p126, %p127
    %p129 = scmp.ne.s32.totalorder %s115, %s116
    %p130 = scmp.eq.s32.totalorder %s17, 1
    %p131 = por %p129, %p130
    %p133 = scmp.ne.s32.totalorder %s116, %s132
    %p134 = scmp.eq.s32.totalorder %s17, 0
    %p135 = por %p133, %p134
    %s136 = ssub.s32 %s18, %s30
    %s137 = ssub.s32 %s19, %s26
    %s138 = sor.u32 %s136, %s137
    %p139 = scmp.eq.s32.totalorder %s138, 0
    %s141 = sadd.s32 %s140, 1
    %s142 = scalar_select %p139, %s140, %s141
    %p145 = pneg %p139
    %p146 = scmp.eq.s32.totalorder %s11, 1
    %p147 = por %p145, %p146
    %p148 = scmp.ne.s32.totalorder %s140, %s143
    %p149 = scmp.eq.s32.totalorder %s11, 0
    %p150 = por %p148, %p149
    %p151 = scmp.ne.s32.totalorder %s140, %s143
    %p152 = scmp.eq.s32.totalorder %s16, 1
    %p153 = por %p151, %p152
    %p154 = scmp.ne.s32.totalorder %s143, %s144
    %p155 = scmp.eq.s32.totalorder %s16, 0
    %p156 = por %p154, %p155
    %p157 = scmp.ne.s32.totalorder %s143, %s144
    %p158 = scmp.eq.s32.totalorder %s17, 1
    %p159 = por %p157, %p158
    %p161 = scmp.ne.s32.totalorder %s144, %s160
    %p162 = scmp.eq.s32.totalorder %s17, 0
    %p163 = por %p161, %p162
    %p164 = scmp.le.s32.totalorder 1, %s11
    %p165 = scmp.lt.s32.totalorder %s11, 3
    %p166 = pnand %p164, %p165
    %p167 = pneg %p166
    // Predicated region
    $region9: #{tpu_custom_call.1} parent=5 // pred_check
      _
    $region10: #{tpu_custom_call.1} parent=5 // pred_check_branch
      %169 = sbr.rel (%p166) target = $region12
    $region11: #{tpu_custom_call.1} parent=5 // pred_region
      %s170 = ssub.s32 %s11, 1
      // Predicated region
      $region13: #{tpu_custom_call.1} parent=11 // pred_check
        %p171 = pneg %p72
      $region14: #{tpu_custom_call.1} parent=11 // pred_check_branch
        %173 = sbr.rel (%p171) target = $region16
      $region15: #{tpu_custom_call.1} parent=11 // pred_region
        _
      $region16: #{tpu_custom_call.1} parent=11 // pred_fallthru
        _
    $region12: #{tpu_custom_call.1} parent=5 // pred_fallthru
      _
    %p174 = scmp.lt.s32.totalorder %s11, 2
    // Predicated region
    $region17: #{tpu_custom_call.1} parent=5 // pred_check
      %p175 = pneg %p174
    $region18: #{tpu_custom_call.1} parent=5 // pred_check_branch
      %177 = sbr.rel (%p175) target = $region20
    $region19: #{tpu_custom_call.1} parent=5 // pred_region
      // Predicated region
      $region21: #{tpu_custom_call.1} parent=19 // pred_check
        %p178 = pneg %p45
      $region22: #{tpu_custom_call.1} parent=19 // pred_check_branch
        %180 = sbr.rel (%p178) target = $region24
      $region23: #{tpu_custom_call.1} parent=19 // pred_region
        %p181 = scmp.lt.s32.totalorder %s18, 1
        %s182 = scalar_select %p181, %s18, 1
        %p183 = scmp.lt.s32.totalorder %s19, 0
        %s184 = scalar_select %p183, %s19, 0
        %s185 = smul.addr %s182, 2
        %s186 = sadd.s32 %s184, %s185
        %s187 = smul.addr %s186, 8
        %s188 = scalar_lea.vmem %s0, %s187
      $region24: #{tpu_custom_call.1} parent=19 // pred_fallthru
        _
    $region20: #{tpu_custom_call.1} parent=5 // pred_fallthru
      _
    %p189 = scmp.le.s32.totalorder 1, %s11
    %p190 = scmp.lt.s32.totalorder %s11, 3
    %p191 = pnand %p189, %p190
    %p192 = pneg %p191
    // Predicated region
    $region25: #{tpu_custom_call.1} parent=5 // pred_check
      _
    $region26: #{tpu_custom_call.1} parent=5 // pred_check_branch
      %194 = sbr.rel (%p191) target = $region28
    $region27: #{tpu_custom_call.1} parent=5 // pred_region
      %s195 = ssub.s32 %s11, 1
      %p196 = scmp.lt.s32.totalorder %s20, 1
      %s197 = scalar_select %p196, %s20, 1
      %p198 = scmp.lt.s32.totalorder %s21, 0
      %s199 = scalar_select %p198, %s21, 0
      %s200 = smul.addr %s197, 2
      %s201 = sadd.s32 %s199, %s200
      %s202 = smul.addr %s201, 8
      %s203 = scalar_lea.vmem %s0, %s202
      %p204 = pneg %p51
      %p205 = pneg %p48
      %p206 = pneg %p72
      %p207 = pneg %p69
      %p208 = pneg %p100
      %p209 = pneg %p97
      %p210 = scmp.lt.s32.totalorder %s20, 1
      %s211 = scalar_select %p210, %s20, 1
      %p212 = scmp.lt.s32.totalorder %s21, 0
      %s213 = scalar_select %p212, %s21, 0
      %s214 = smul.addr %s211, 2
      %s215 = sadd.s32 %s213, %s214
      %s216 = smul.addr %s215, 8
      %s217 = scalar_lea.vmem %s2, %s216
      %p218 = pneg %p128
      %p219 = pneg %p125
      %p220 = scmp.lt.s32.totalorder %s20, 1
      %s221 = scalar_select %p220, %s20, 1
      %p222 = scmp.lt.s32.totalorder %s21, 0
      %s223 = scalar_select %p222, %s21, 0
      %s224 = smul.addr %s221, 2
      %s225 = sadd.s32 %s223, %s224
      %s226 = smul.addr %s225, 8
      %s227 = scalar_lea.vmem %s3, %s226
      %p228 = pneg %p156
      %p229 = pneg %p153
      %p230 = scmp.lt.s32.totalorder %s20, 1
      %s231 = scalar_select %p230, %s20, 1
      %p232 = scmp.lt.s32.totalorder %s21, 0
      %s233 = scalar_select %p232, %s21, 0
      %s234 = smul.addr %s231, 2
      %s235 = sadd.s32 %s233, %s234
      %s236 = smul.addr %s235, 8
      %s237 = scalar_lea.vmem %s4, %s236
      %p238 = scmp.lt.s32.totalorder %s20, 1
      %s239 = scalar_select %p238, %s20, 1
      %p240 = scmp.lt.s32.totalorder %s21, 0
      %s241 = scalar_select %p240, %s21, 0
      %s242 = smul.addr %s239, 2
      %s243 = sadd.s32 %s241, %s242
      %s244 = smul.addr %s243, 8
      %s245 = scalar_lea.vmem %s0, %s244
      %p246 = scmp.lt.s32.totalorder %s20, 1
      %s247 = scalar_select %p246, %s20, 1
      %p248 = scmp.lt.s32.totalorder %s21, 0
      %s249 = scalar_select %p248, %s21, 0
      %s250 = smul.addr %s247, 2
      %s251 = sadd.s32 %s249, %s250
      %s252 = smul.addr %s251, 8
      %s253 = scalar_lea.vmem %s2, %s252
      %p254 = scmp.lt.s32.totalorder %s20, 1
      %s255 = scalar_select %p254, %s20, 1
      %p256 = scmp.lt.s32.totalorder %s21, 0
      %s257 = scalar_select %p256, %s21, 0
      %s258 = smul.addr %s255, 2
      %s259 = sadd.s32 %s257, %s258
      %s260 = smul.addr %s259, 8
      %s261 = scalar_lea.vmem %s3, %s260
      %p262 = scmp.lt.s32.totalorder %s20, 1
      %s263 = scalar_select %p262, %s20, 1
      %p264 = scmp.lt.s32.totalorder %s21, 0
      %s265 = scalar_select %p264, %s21, 0
      %s266 = smul.addr %s263, 2
      %s267 = sadd.s32 %s265, %s266
      %s268 = smul.addr %s267, 8
      %s269 = scalar_lea.vmem %s4, %s268
      %v270 = vld [vmem:[%s245] sm:$0xff]
      %v271 = vld [vmem:[%s245 + $0x8] sm:$0xff]
      %v272 = vld [vmem:[%s1] sm:$0xff]
      %v273 = vld [vmem:[%s1 + $0x8] sm:$0xff]
      %v274 = vld [vmem:[%s1 + $0x10] sm:$0x3]
      %vm275 = vcmask 130048
      %v277 = vsel %vm275, %v272, 0
      %v280 = vsel %vm275, %v273, 0
      %v283 = vsel %vm275, %v274, 0
      %285 = vmatprep.subr.mxu0 0.0
      %286 = vmatpush1.msra.mxu0 %v270
      %287 = vmatprep.subr.mxu0 0.0
      %288 = vmatpush1.msra.mxu0 %v271
      %289 = vmatprep.subr.mxu0 0.0
      %290 = vmatpush1.msra.mxu0 0.0
      %291 = vmatprep.subr.mxu0 0.0
      %292 = vmatpush1.msra.mxu0 0.0
      %293 = vmatprep.subr.mxu0 0.0
      %294 = vmatpush1.msra.mxu0 0.0
      %295 = vmatprep.subr.mxu0 0.0
      %296 = vmatpush1.msra.mxu0 0.0
      %297 = vmatprep.subr.mxu0 0.0
      %298 = vmatpush1.msra.mxu0 0.0
      %299 = vmatprep.subr.mxu0 0.0
      %300 = vmatpush1.msra.mxu0 0.0
      %301 = vmatprep.subr.mxu0 0.0
      %302 = vmatpush1.msra.mxu0 0.0
      %303 = vmatprep.subr.mxu0 0.0
      %304 = vmatpush1.msra.mxu0 0.0
      %305 = vmatprep.subr.mxu0 0.0
      %306 = vmatpush1.msra.mxu0 0.0
      %307 = vmatprep.subr.mxu0 0.0
      %308 = vmatpush1.msra.mxu0 0.0
      %309 = vmatprep.subr.mxu0 0.0
      %310 = vmatpush1.msra.mxu0 0.0
      %311 = vmatprep.subr.mxu0 0.0
      %312 = vmatpush1.msra.mxu0 0.0
      %313 = vmatprep.subr.mxu0 0.0
      %314 = vmatpush1.msra.mxu0 0.0
      %315 = vmatprep.subr.mxu0 0.0
      %316 = vmatpush1.msra.mxu0 0.0
      %317 = vmatprep.subr.mxu0 0.0
      %318 = vmatpush1.msra.mxu0 0.0
      %319 = vmatprep.subr.mxu0 0.0
      %320 = vmatpush1.msra.mxu0 0.0
      %321 = vmatprep.subr.mxu0 0.0
      %322 = vmatpush1.msra.mxu0 0.0
      %323 = vmatprep.subr.mxu0 0.0
      %324 = vmatpush1.msra.mxu0 0.0
      %325 = vmatprep.subr.mxu0 0.0
      %326 = vmatpush1.msra.mxu0 0.0
      %327 = vmatprep.subr.mxu0 0.0
      %328 = vmatpush1.msra.mxu0 0.0
      %329 = vmatprep.subr.mxu0 0.0
      %330 = vmatpush1.msra.mxu0 0.0
      %331 = vmatprep.subr.mxu0 0.0
      %332 = vmatpush1.msra.mxu0 0.0
      %333 = vmatprep.subr.mxu0 0.0
      %334 = vmatpush1.msra.mxu0 0.0
      %335 = vmatprep.subr.mxu0 0.0
      %336 = vmatpush1.msra.mxu0 0.0
      %337 = vmatprep.subr.mxu0 0.0
      %338 = vmatpush1.msra.mxu0 0.0
      %339 = vmatprep.subr.mxu0 0.0
      %340 = vmatpush1.msra.mxu0 0.0
      %341 = vmatprep.subr.mxu0 0.0
      %342 = vmatpush1.msra.mxu0 0.0
      %343 = vmatprep.subr.mxu0 0.0
      %344 = vmatpush1.msra.mxu0 0.0
      %345 = vmatprep.subr.mxu0 0.0
      %346 = vmatpush1.msra.mxu0 0.0
      %347 = vmatprep.subr.mxu0 0.0
      %348 = vmatpush1.msra.mxu0 0.0
      %349 = vmatprep.mubr.f32.mxu0 0.0
      %350 = vmatmul.mubr.f32.gmra.mrb[0].mxu0 %v277
      %v351 = vpop.f32.mrb[0].mxu0
      %v352 = vadd.f32 0.0, %v351
      %v353 = vpop.f32.mrb[0].mxu0
      %354 = vmatprep.mubr.f32.mxu0 0.0
      %355 = vmatmul.mubr.f32.gmra.mrb[0].mxu0 %v280
      %v356 = vpop.f32.mrb[0].mxu0
      %v357 = vadd.f32 0.0, %v356
      %v358 = vpop.f32.mrb[0].mxu0
      %359 = vmatprep.mubr.f32.mxu0 0.0
      %360 = vmatmul.mubr.f32.gmra.mrb[0].mxu0 %v283
      %v361 = vpop.f32.mrb[0].mxu0
      %v362 = vadd.f32 0.0, %v361
      %v363 = vpop.f32.mrb[0].mxu0
      %364 = vdwg.mxu0
      %365 = vst [vmem:[%s253] sm:$0xff] %v352
      %366 = vst [vmem:[%s253 + $0x8] sm:$0x1] %v357
      %367 = vst [vmem:[%s261 - $0x1] sm:$0xfe] %v357
      %368 = vst [vmem:[%s261 + $0x7] sm:$0x3] %v362
      %v369 = vmul.f32 %v352, %v352
      %v370 = vmul.f32 %v357, %v357
      %v371 = vmul.f32 %v362, %v362
      %vm374 = vcmask 1046528
      %v375 = vrot.slane %v370, 1
      %v376 = vrot.slane %v371, 1
      %v377 = vsel %vm374, %v375, %v376
      %v380 = vadd.f32 %v369, %v377
      %v381 = vadd.f32 %v370, %v376
      %v382 = vrsqrt.pop %v380
      %v383 = vmul.f32 %v380, %v382
      %vm384 = vcmp.eq.f32.partialorder %v380, inf
      %v385 = vsel %vm384, %v380, %v383
      %vm386 = vcmp.eq.f32.partialorder %v380, 0.0
      %v387 = vand.u32 %v380, 2147483648
      %v388 = vsel %vm386, %v387, %v385
      %v389 = vrsqrt.pop %v381
      %v390 = vmul.f32 %v381, %v389
      %vm391 = vcmp.eq.f32.partialorder %v381, inf
      %v392 = vsel %vm391, %v381, %v390
      %vm393 = vcmp.eq.f32.partialorder %v381, 0.0
      %v394 = vand.u32 %v381, 2147483648
      %v395 = vsel %vm393, %v394, %v392
      %396 = vst [vmem:[%s269] sm:$0xff] %v388
      %397 = vst [vmem:[%s269 + $0x8] sm:$0x1] %v395
      %p398 = scmp.lt.s32.totalorder %s20, 1
      %s399 = scalar_select %p398, %s20, 1
      %p400 = scmp.lt.s32.totalorder %s21, 0
      %s401 = scalar_select %p400, %s21, 0
      %s402 = smul.addr %s399, 2
      %s403 = sadd.s32 %s401, %s402
      %s404 = smul.addr %s403, 8
      %s405 = scalar_lea.vmem %s2, %s404
      %p406 = scmp.lt.s32.totalorder %s20, 1
      %s407 = scalar_select %p406, %s20, 1
      %p408 = scmp.lt.s32.totalorder %s21, 0
      %s409 = scalar_select %p408, %s21, 0
      %s410 = smul.addr %s407, 2
      %s411 = sadd.s32 %s409, %s410
      %s412 = smul.addr %s411, 8
      %s413 = scalar_lea.vmem %s3, %s412
      %p414 = scmp.lt.s32.totalorder %s20, 1
      %s415 = scalar_select %p414, %s20, 1
      %p416 = scmp.lt.s32.totalorder %s21, 0
      %s417 = scalar_select %p416, %s21, 0
      %s418 = smul.addr %s415, 2
      %s419 = sadd.s32 %s417, %s418
      %s420 = smul.addr %s419, 8
      %s421 = scalar_lea.vmem %s4, %s420
      // Predicated region
      $region29: #{tpu_custom_call.1} parent=27 // pred_check
        %p422 = pneg %p97
      $region30: #{tpu_custom_call.1} parent=27 // pred_check_branch
        %424 = sbr.rel (%p422) target = $region32
      $region31: #{tpu_custom_call.1} parent=27 // pred_region
        _
      $region32: #{tpu_custom_call.1} parent=27 // pred_fallthru
        _
      // Predicated region
      $region33: #{tpu_custom_call.1} parent=27 // pred_check
        %p425 = pneg %p125
      $region34: #{tpu_custom_call.1} parent=27 // pred_check_branch
        %427 = sbr.rel (%p425) target = $region36
      $region35: #{tpu_custom_call.1} parent=27 // pred_region
        _
      $region36: #{tpu_custom_call.1} parent=27 // pred_fallthru
        _
      // Predicated region
      $region37: #{tpu_custom_call.1} parent=27 // pred_check
        %p428 = pneg %p153
      $region38: #{tpu_custom_call.1} parent=27 // pred_check_branch
        %430 = sbr.rel (%p428) target = $region40
      $region39: #{tpu_custom_call.1} parent=27 // pred_region
        _
      $region40: #{tpu_custom_call.1} parent=27 // pred_fallthru
        _
    $region28: #{tpu_custom_call.1} parent=5 // pred_fallthru
      _
    %p431 = scmp.le.s32.totalorder 2, %s11
    // Predicated region
    $region41: #{tpu_custom_call.1} parent=5 // pred_check
      %p432 = pneg %p431
    $region42: #{tpu_custom_call.1} parent=5 // pred_check_branch
      %434 = sbr.rel (%p432) target = $region44
    $region43: #{tpu_custom_call.1} parent=5 // pred_region
      %s435 = ssub.s32 %s11, 2
      // Predicated region
      $region45: #{tpu_custom_call.1} parent=43 // pred_check
        %p436 = pneg %p103
      $region46: #{tpu_custom_call.1} parent=43 // pred_check_branch
        %438 = sbr.rel (%p436) target = $region48
      $region47: #{tpu_custom_call.1} parent=43 // pred_region
        %p439 = scmp.lt.s32.totalorder %s22, 1
        %s440 = scalar_select %p439, %s22, 1
        %p441 = scmp.lt.s32.totalorder %s23, 0
        %s442 = scalar_select %p441, %s23, 0
        %s443 = smul.addr %s440, 2
        %s444 = sadd.s32 %s442, %s443
        %s445 = smul.addr %s444, 8
        %s446 = scalar_lea.vmem %s2, %s445
      $region48: #{tpu_custom_call.1} parent=43 // pred_fallthru
        _
      // Predicated region
      $region49: #{tpu_custom_call.1} parent=43 // pred_check
        %p447 = pneg %p131
      $region50: #{tpu_custom_call.1} parent=43 // pred_check_branch
        %449 = sbr.rel (%p447) target = $region52
      $region51: #{tpu_custom_call.1} parent=43 // pred_region
        %p450 = scmp.lt.s32.totalorder %s22, 1
        %s451 = scalar_select %p450, %s22, 1
        %p452 = scmp.lt.s32.totalorder %s23, 0
        %s453 = scalar_select %p452, %s23, 0
        %s454 = smul.addr %s451, 2
        %s455 = sadd.s32 %s453, %s454
        %s456 = smul.addr %s455, 8
        %s457 = scalar_lea.vmem %s3, %s456
      $region52: #{tpu_custom_call.1} parent=43 // pred_fallthru
        _
      // Predicated region
      $region53: #{tpu_custom_call.1} parent=43 // pred_check
        %p458 = pneg %p159
      $region54: #{tpu_custom_call.1} parent=43 // pred_check_branch
        %460 = sbr.rel (%p458) target = $region56
      $region55: #{tpu_custom_call.1} parent=43 // pred_region
        %p461 = scmp.lt.s32.totalorder %s22, 1
        %s462 = scalar_select %p461, %s22, 1
        %p463 = scmp.lt.s32.totalorder %s23, 0
        %s464 = scalar_select %p463, %s23, 0
        %s465 = smul.addr %s462, 2
        %s466 = sadd.s32 %s464, %s465
        %s467 = smul.addr %s466, 8
        %s468 = scalar_lea.vmem %s4, %s467
      $region56: #{tpu_custom_call.1} parent=43 // pred_fallthru
        _
    $region44: #{tpu_custom_call.1} parent=5 // pred_fallthru
      _
  $region6: #{tpu_custom_call.1} parent=0 // loop_footer
    %s15 = sadd.s32 1, %s11
  $region7: #{tpu_custom_call.1} parent=0 // loop_footer_branch
    %10 = sbr.rel target = $region3
  $region8: #{tpu_custom_call.1} parent=0 // loop_exit
    _

</llo_original>
